<compile_context>
chip_gen: v7x
topology: tpu7x:2x2x1
jax: 0.10.0
libtpu: 0.0.40
codegen_flags: <defaults>
</compile_context>

<pallas_src>
import functools

import jax
import jax.numpy as jnp
from jax.experimental import pallas as pl
from jax.experimental.pallas import tpu as pltpu


def _round_up(x, m):
    return ((x + m - 1) // m) * m


def _tensorcores_per_chip():
    """Best-effort detection of multi-TensorCore chips (v7x). Defaults to 1."""
    try:
        kind = jax.devices()[0].device_kind.lower()
    except Exception:
        return 1
    return 2 if "7" in kind else 1


def _epilogue(acc, b1_ref, w2_ref, b2_ref, o_ref):
    # Bias + ReLU on the f32 accumulator (plain VPU f32 math -> v5e-safe).
    # Padded hidden lanes: ReLU(0 + 0) = 0, then multiply zero rows of W2 -> no effect.
    h = jnp.maximum(acc + b1_ref[...], 0.0)
    # Second linear: bf16 operands, f32 accumulation. Padded speaker lanes carry a
    # -1e30 bias so exp(...) == 0 there.
    logits = jnp.dot(h.astype(w2_ref.dtype), w2_ref[...],
                     preferred_element_type=jnp.float32) + b2_ref[...]
    # Numerically-stable softmax over the last (lane) axis; exact division so rows
    # sum to 1 to f32 precision (the policy is sampled from).
    m = jnp.max(logits, axis=-1, keepdims=True)
    e = jnp.exp(logits - m)
    denom = jnp.sum(e, axis=-1, keepdims=True)
    o_ref[...] = (e / denom).astype(o_ref.dtype)


def _policy_kernel_single_k(x_ref, w1_ref, b1_ref, w2_ref, b2_ref, o_ref):
    """Fast path: whole contraction in one K tile -> no accumulator round trips."""
    x_bf = x_ref[...].astype(jnp.bfloat16)   # per-tile cast; hidden under DMA/MXU
    acc = jnp.dot(x_bf, w1_ref[...], preferred_element_type=jnp.float32)
    _epilogue(acc, b1_ref, w2_ref, b2_ref, o_ref)


def _policy_kernel_multi_k(x_ref, w1_ref, b1_ref, w2_ref, b2_ref, o_ref, acc_ref):
    """K-tiled path: grid = (batch_tiles, k_tiles); K last, marked 'arbitrary'."""
    k = pl.program_id(1)

    @pl.when(k == 0)
    def _():
        acc_ref[...] = jnp.zeros_like(acc_ref)

    x_bf = x_ref[...].astype(jnp.bfloat16)
    acc_ref[...] += jnp.dot(x_bf, w1_ref[...], preferred_element_type=jnp.float32)

    @pl.when(k == pl.num_programs(1) - 1)
    def _():
        _epilogue(acc_ref[...], b1_ref, w2_ref, b2_ref, o_ref)


def prepare_policy_params(w1, b1, w2, b2):
    """One-time weight prep (hoist OUTSIDE the per-step RL loop).

    Weights are pre-transposed relative to torch.nn.Linear: w1 (F, H), w2 (H, S).
    Pads F/H/S to multiples of 128, casts matmul operands to bf16; biases stay f32.
    Padded speaker lanes get a -1e30 bias so they softmax to exactly 0.
    """
    F, H = w1.shape
    S = w2.shape[1]
    F_pad, H_pad, S_pad = (_round_up(d, 128) for d in (F, H, S))
    bf16, f32 = jnp.bfloat16, jnp.float32
    w1_p = jnp.pad(w1.astype(bf16), ((0, F_pad - F), (0, H_pad - H)))
    b1_p = jnp.pad(b1.astype(f32).reshape(1, H), ((0, 0), (0, H_pad - H)))
    w2_p = jnp.pad(w2.astype(bf16), ((0, H_pad - H), (0, S_pad - S)))
    b2_p = jnp.pad(b2.astype(f32).reshape(1, S), ((0, 0), (0, S_pad - S)),
                   constant_values=-1e30)
    return w1_p, b1_p, w2_p, b2_p


@functools.partial(jax.jit, static_argnames=("num_speakers", "block_b", "block_k"))
def policy_network_forward(x, w1_p, b1_p, w2_p, b2_p, *, num_speakers,
                           block_b=512, block_k=512):
    """x: (B, F) float; padded params from prepare_policy_params.

    Returns f32 softmax probabilities of shape (B, num_speakers).
    """
    B, F = x.shape
    F_pad, H_pad = w1_p.shape
    S_pad = w2_p.shape[1]
    f32 = jnp.float32

    # ---- Tile sizes --------------------------------------------------------
    # Batch tile: multiple of 16 (bf16 sublane packing of the MXU LHS operand).
    bb = _round_up(min(block_b, B), 16)
    # v7x has 2 TensorCores: ensure the 'parallel' batch axis has >= 2 tiles so
    # both cores get work. No effect on v5e/v6e (single TC).
    n_tc = _tensorcores_per_chip()
    if n_tc > 1 and B > 32 and pl.cdiv(B, bb) < n_tc:
        bb = _round_up(pl.cdiv(B, n_tc), 16)
    # Bound VMEM growth for very large hidden dims (v7x has only 64 MiB VMEM):
    # acc is (bb, H_pad) f32 and the W1 K-tile is (tk, H_pad) bf16 double-buffered.
    block_k_eff = block_k
    if H_pad >= 2048:
        bb = min(bb, 128)
        block_k_eff = min(block_k_eff, 256)
    # Contraction tile: multiple of 128 that divides F_pad (so zero-padded K only).
    tk = min(_round_up(block_k_eff, 128), F_pad)
    while F_pad % tk:
        tk -= 128

    nb = pl.cdiv(B, bb)
    nk = F_pad // tk
    B_pad = nb * bb

    # ---- Input: keep native dtype (bf16 cast happens per-tile in-kernel). Pad
    # with zeros only when batch / feature extents are ragged.
    pad_b, pad_f = B_pad - B, F_pad - F
    x_in = jnp.pad(x, ((0, pad_b), (0, pad_f))) if (pad_b or pad_f) else x

    cost = pl.CostEstimate(
        flops=2 * B * F_pad * H_pad + 2 * B * H_pad * S_pad,
        transcendentals=B * S_pad,
        bytes_accessed=(x_in.size * x_in.dtype.itemsize + w1_p.size * 2
                        + w2_p.size * 2 + b1_p.size * 4 + b2_p.size * 4
                        + B_pad * S_pad * 4),
    )
    compiler_params = pltpu.CompilerParams(
        dimension_semantics=(("parallel",) if nk == 1
                             else ("parallel", "arbitrary")),
        vmem_limit_bytes=32 * 1024 * 1024,
    )

    if nk == 1:
        kernel = _policy_kernel_single_k
        grid_spec = pltpu.PrefetchScalarGridSpec(
            num_scalar_prefetch=0,
            grid=(nb,),
            in_specs=[
                pl.BlockSpec((bb, tk), lambda i: (i, 0)),         # x tile (f32)
                pl.BlockSpec((tk, H_pad), lambda i: (0, 0)),      # W1 (resident)
                pl.BlockSpec((1, H_pad), lambda i: (0, 0)),       # b1 (resident)
                pl.BlockSpec((H_pad, S_pad), lambda i: (0, 0)),   # W2 (resident)
                pl.BlockSpec((1, S_pad), lambda i: (0, 0)),       # b2 (resident)
            ],
            out_specs=pl.BlockSpec((bb, S_pad), lambda i: (i, 0)),
        )
    else:
        kernel = _policy_kernel_multi_k
        grid_spec = pltpu.PrefetchScalarGridSpec(
            num_scalar_prefetch=0,
            grid=(nb, nk),
            in_specs=[
                pl.BlockSpec((bb, tk), lambda i, k: (i, k)),       # x K-tile (f32)
                pl.BlockSpec((tk, H_pad), lambda i, k: (k, 0)),    # W1 K-tile
                pl.BlockSpec((1, H_pad), lambda i, k: (0, 0)),     # b1 (resident)
                pl.BlockSpec((H_pad, S_pad), lambda i, k: (0, 0)), # W2 (resident)
                pl.BlockSpec((1, S_pad), lambda i, k: (0, 0)),     # b2 (resident)
            ],
            out_specs=pl.BlockSpec((bb, S_pad), lambda i, k: (i, 0)),
            scratch_shapes=[pltpu.VMEM((bb, H_pad), f32)],         # f32 accumulator
        )

    out = pl.pallas_call(
        kernel,
        out_shape=jax.ShapeDtypeStruct((B_pad, S_pad), f32),
        grid_spec=grid_spec,
        compiler_params=compiler_params,
        cost_estimate=cost,
    )(x_in, w1_p, b1_p, w2_p, b2_p)

    return out[:B, :num_speakers]


def init_policy_params(key, feature_dim, num_speakers_max, dtype=jnp.float32):
    """Deterministic synthetic init (PyTorch-like uniform fan-in scaling)."""
    hidden = max(64, feature_dim // 2)
    k1, k2, k3, k4 = jax.random.split(key, 4)
    s1 = 1.0 / jnp.sqrt(feature_dim)
    s2 = 1.0 / jnp.sqrt(hidden)
    w1 = jax.random.uniform(k1, (feature_dim, hidden), dtype, -s1, s1)
    b1 = jax.random.uniform(k2, (1, hidden), dtype, -s1, s1)
    w2 = jax.random.uniform(k3, (hidden, num_speakers_max), dtype, -s2, s2)
    b2 = jax.random.uniform(k4, (1, num_speakers_max), dtype, -s2, s2)
    return w1, b1, w2, b2


def _reference(x, w1, b1, w2, b2):
    """Plain-JAX reference with the same bf16-operand / f32-accumulate contract."""
    bf16 = jnp.bfloat16
    h = jnp.maximum(
        jnp.dot(x.astype(bf16), w1.astype(bf16),
                preferred_element_type=jnp.float32)
        + b1.astype(jnp.float32).reshape(1, -1), 0.0)
    logits = (jnp.dot(h.astype(bf16), w2.astype(bf16),
                      preferred_element_type=jnp.float32)
              + b2.astype(jnp.float32).reshape(1, -1))
    return jax.nn.softmax(logits, axis=-1)


if __name__ == "__main__":
    key = jax.random.PRNGKey(0)

    # (batch, feature_dim, num_speakers, block_k) — small shapes:
    #   1) aligned single-K fast path, 2) ragged batch, 3) K-tiled accumulator path
    #      with non-power-of-two hidden (H=192 -> H_pad=256).
    cases = [
        (32, 128, 8, 512),
        (7, 128, 8, 512),
        (24, 384, 8, 128),
    ]

    for batch, feature_dim, num_speakers, block_k in cases:
        key, kp, kx = jax.random.split(key, 3)
        w1, b1, w2, b2 = init_policy_params(kp, feature_dim, num_speakers)
        params = prepare_policy_params(w1, b1, w2, b2)   # one-time prep
        x = jax.random.normal(kx, (batch, feature_dim), jnp.float32)

        out = jax.block_until_ready(
            policy_network_forward(x, *params, num_speakers=num_speakers,
                                   block_k=block_k))
        ref = _reference(x, w1, b1, w2, b2)

        assert out.shape == (batch, num_speakers)
        assert out.dtype == jnp.float32
        assert jnp.allclose(out, ref, atol=5e-3, rtol=5e-3)
        assert jnp.allclose(jnp.sum(out, axis=-1), 1.0, atol=1e-4)

    print("KERNEL_OK")
</pallas_src>

<mosaic_0001>
module attributes {stable_mosaic.version = 11 : i64} {
  func.func @_policy_kernel_single_k(%arg0: i32, %arg1: memref<32x128xf32, #tpu.memory_space<vmem>>, %arg2: memref<128x128xbf16, #tpu.memory_space<vmem>>, %arg3: memref<1x128xf32, #tpu.memory_space<vmem>>, %arg4: memref<128x128xbf16, #tpu.memory_space<vmem>>, %arg5: memref<1x128xf32, #tpu.memory_space<vmem>>, %arg6: memref<32x128xf32, #tpu.memory_space<vmem>>) attributes {dimension_semantics = [#tpu.dimension_semantics<parallel>], iteration_bounds = array<i64: 1>, scalar_prefetch = 0 : i64, scratch_operands = 0 : i64, tpu.core_type = #tpu.core_type<tc>, window_params = [{transform_indices = @transform_0, window_bounds = array<i64: 32, 128>}, {pipeline_mode = #tpu.pipeline_mode<synchronous>, transform_indices = @transform_1, window_bounds = array<i64: 128, 128>}, {pipeline_mode = #tpu.pipeline_mode<synchronous>, transform_indices = @transform_2, window_bounds = array<i64: 1, 128>}, {pipeline_mode = #tpu.pipeline_mode<synchronous>, transform_indices = @transform_3, window_bounds = array<i64: 128, 128>}, {pipeline_mode = #tpu.pipeline_mode<synchronous>, transform_indices = @transform_4, window_bounds = array<i64: 1, 128>}, {transform_indices = @transform_5, window_bounds = array<i64: 32, 128>}]} {
    %c0 = arith.constant 0 : index
    %c0_0 = arith.constant 0 : index
    %0 = vector.load %arg1[%c0, %c0_0] : memref<32x128xf32, #tpu.memory_space<vmem>>, vector<32x128xf32>
    %1 = arith.truncf %0 : vector<32x128xf32> to vector<32x128xbf16>
    %c0_1 = arith.constant 0 : index
    %c0_2 = arith.constant 0 : index
    %2 = vector.load %arg2[%c0_1, %c0_2] : memref<128x128xbf16, #tpu.memory_space<vmem>>, vector<128x128xbf16>
    %cst = arith.constant dense<0.000000e+00> : vector<32x128xf32>
    %3 = tpu.matmul %1, %2, %cst {dimension_numbers = #tpu.dot_dimension_numbers<[1], [0], [0], [1], [0, 0, 1, 1], [], []>} : vector<32x128xbf16>, vector<128x128xbf16>, vector<32x128xf32> -> vector<32x128xf32>
    %c0_3 = arith.constant 0 : index
    %c0_4 = arith.constant 0 : index
    %4 = vector.load %arg3[%c0_3, %c0_4] : memref<1x128xf32, #tpu.memory_space<vmem>>, vector<1x128xf32>
    %5 = vector.broadcast %4 : vector<1x128xf32> to vector<32x128xf32>
    %6 = arith.addf %3, %5 : vector<32x128xf32>
    %cst_5 = arith.constant 0.000000e+00 : f32
    %7 = vector.broadcast %cst_5 : f32 to vector<32x128xf32>
    %8 = arith.maximumf %6, %7 : vector<32x128xf32>
    %9 = arith.truncf %8 : vector<32x128xf32> to vector<32x128xbf16>
    %c0_6 = arith.constant 0 : index
    %c0_7 = arith.constant 0 : index
    %10 = vector.load %arg4[%c0_6, %c0_7] : memref<128x128xbf16, #tpu.memory_space<vmem>>, vector<128x128xbf16>
    %cst_8 = arith.constant dense<0.000000e+00> : vector<32x128xf32>
    %11 = tpu.matmul %9, %10, %cst_8 {dimension_numbers = #tpu.dot_dimension_numbers<[1], [0], [0], [1], [0, 0, 1, 1], [], []>} : vector<32x128xbf16>, vector<128x128xbf16>, vector<32x128xf32> -> vector<32x128xf32>
    %c0_9 = arith.constant 0 : index
    %c0_10 = arith.constant 0 : index
    %12 = vector.load %arg5[%c0_9, %c0_10] : memref<1x128xf32, #tpu.memory_space<vmem>>, vector<1x128xf32>
    %13 = vector.broadcast %12 : vector<1x128xf32> to vector<32x128xf32>
    %14 = arith.addf %11, %13 : vector<32x128xf32>
    %cst_11 = arith.constant dense<0xFF800000> : vector<32xf32>
    %15 = vector.multi_reduction <maximumf>, %14, %cst_11 [1] : vector<32x128xf32> to vector<32xf32>
    %16 = vector.shape_cast %15 : vector<32xf32> to vector<32x1xf32>
    %17 = vector.broadcast %16 : vector<32x1xf32> to vector<32x128xf32>
    %18 = arith.subf %14, %17 : vector<32x128xf32>
    %19 = math.exp %18 : vector<32x128xf32>
    %cst_12 = arith.constant dense<0.000000e+00> : vector<32xf32>
    %20 = vector.multi_reduction <add>, %19, %cst_12 [1] : vector<32x128xf32> to vector<32xf32>
    %21 = vector.shape_cast %20 : vector<32xf32> to vector<32x1xf32>
    %22 = vector.broadcast %21 : vector<32x1xf32> to vector<32x128xf32>
    %23 = arith.divf %19, %22 : vector<32x128xf32>
    %c0_13 = arith.constant 0 : index
    %c0_14 = arith.constant 0 : index
    %24 = vector.load %arg6[%c0_13, %c0_14] : memref<32x128xf32, #tpu.memory_space<vmem>>, vector<32x128xf32>
    tpu.vector_store %arg6[%c0_13, %c0_14], %23 {strides = array<i32>} : memref<32x128xf32, #tpu.memory_space<vmem>>, vector<32x128xf32>,
    return
  }
  func.func @transform_0(%arg0: i32) -> (i32, i32) {
    %c0_i32 = arith.constant 0 : i32
    %c0_i32_0 = arith.constant 0 : i32
    return %arg0, %c0_i32 : i32, i32
  }
  func.func @transform_1(%arg0: i32) -> (i32, i32) {
    %c0_i32 = arith.constant 0 : i32
    %c0_i32_0 = arith.constant 0 : i32
    %c0_i32_1 = arith.constant 0 : i32
    return %c0_i32, %c0_i32_0 : i32, i32
  }
  func.func @transform_2(%arg0: i32) -> (i32, i32) {
    %c0_i32 = arith.constant 0 : i32
    %c0_i32_0 = arith.constant 0 : i32
    %c0_i32_1 = arith.constant 0 : i32
    return %c0_i32, %c0_i32_0 : i32, i32
  }
  func.func @transform_3(%arg0: i32) -> (i32, i32) {
    %c0_i32 = arith.constant 0 : i32
    %c0_i32_0 = arith.constant 0 : i32
    %c0_i32_1 = arith.constant 0 : i32
    return %c0_i32, %c0_i32_0 : i32, i32
  }
  func.func @transform_4(%arg0: i32) -> (i32, i32) {
    %c0_i32 = arith.constant 0 : i32
    %c0_i32_0 = arith.constant 0 : i32
    %c0_i32_1 = arith.constant 0 : i32
    return %c0_i32, %c0_i32_0 : i32, i32
  }
  func.func @transform_5(%arg0: i32) -> (i32, i32) {
    %c0_i32 = arith.constant 0 : i32
    %c0_i32_0 = arith.constant 0 : i32
    return %arg0, %c0_i32 : i32, i32
  }
}

</mosaic_0001>

<llo_original>
// kernel: policy_network_forward.1
$region0: #{policy_network_forward.1}
  #allocation0 [shape = 'u32[]', space=smem, size = 0x4, offset = 0x4, fixed_abs, tag = 'smem constant byte address 0x4 - core index']
  #allocation1 [shape = 'u32[144,128]{1,0:T(1,128)}', space=vmem, size = 0x12000, scoped, tag = 'internal scratch']
  %s0 = inlined_call_operand.hbm [shape: f32[32,128], index: 0, kind: input, shape index: {}]
  %s1 = inlined_call_operand.hbm [shape: bf16[128,128], index: 1, kind: input, shape index: {}]
  %s2 = inlined_call_operand.vmem [shape: f32[1,128], index: 2, kind: input, shape index: {}]
  %s3 = inlined_call_operand.hbm [shape: bf16[128,128], index: 3, kind: input, shape index: {}]
  %s4 = inlined_call_operand.vmem [shape: f32[1,128], index: 4, kind: input, shape index: {}]
  %s5 = inlined_call_operand.vmem [shape: f32[32,128], index: 5, kind: output, shape index: {}]
  %s6 = sld [smem:[#allocation0]]
  $region42: #{policy_network_forward.1} parent=0
    _
  %s8 = ssub.s32 1, %s6
  %s9 = scalar_select 0, %s8, %s6
  $region1: #{policy_network_forward.1} parent=0
    #allocation2 [shape = 'u8[16384]{0}', space=vmem, size = 0x4000, scoped, tag = 'input window, operand 0, single buffered']
    #allocation3 [shape = 's32[1]{0}', space=sflag, size = 0x4, scoped, tag = 'scoped memory for policy_network_forward.1']
    #allocation4 [shape = 'u8[32768]{0}', space=vmem, size = 0x8000, scoped, tag = 'input window, operand 1, single buffered']
    #allocation5 [shape = 's32[1]{0}', space=sflag, size = 0x4, scoped, tag = 'scoped memory for policy_network_forward.1']
    #allocation6 [shape = 'u8[32768]{0}', space=vmem, size = 0x8000, scoped, tag = 'input window, operand 3, single buffered']
    %10 = vsyncpa [#allocation3], 0
    %11 = vsyncpa [#allocation5], 0
    // Predicated region
    $region2: #{policy_network_forward.1} parent=1 // pred_check
      _
    $region3: #{policy_network_forward.1} parent=1 // pred_check_branch
      %13 = sbr.rel (0) target = $region5
    $region4: #{policy_network_forward.1} parent=1 // pred_region
      %s15 = ssub.s32 512, 512
      %16 = vsyncadd [#allocation3], %s15
      %s17 = sshll.u32 [#allocation2], 4
      %s18 = int_to_ptr.vmem [resolvable:$true] %s17
      %23 = dma.hbm_to_vmem [thread:$0]  %s0, 512, %s18, [#allocation3], 128, 128, 8
    $region5: #{policy_network_forward.1} parent=1 // pred_fallthru
      _
    // Predicated region
    $region6: #{policy_network_forward.1} parent=1 // pred_check
      _
    $region7: #{policy_network_forward.1} parent=1 // pred_check_branch
      %25 = sbr.rel (0) target = $region9
    $region8: #{policy_network_forward.1} parent=1 // pred_region
      %s27 = ssub.s32 1024, 1024
      %28 = vsyncadd [#allocation5], %s27
      %s29 = sshll.u32 [#allocation4], 4
      %s30 = int_to_ptr.vmem [resolvable:$true] %s29
      %35 = dma.hbm_to_vmem [thread:$0]  %s1, 1024, %s30, [#allocation5], 64, 64, 4
    $region9: #{policy_network_forward.1} parent=1 // pred_fallthru
      _
    // Predicated region
    $region10: #{policy_network_forward.1} parent=1 // pred_check
      _
    $region11: #{policy_network_forward.1} parent=1 // pred_check_branch
      %37 = sbr.rel (0) target = $region13
    $region12: #{policy_network_forward.1} parent=1 // pred_region
      _
    $region13: #{policy_network_forward.1} parent=1 // pred_fallthru
      _
    // Predicated region
    $region14: #{policy_network_forward.1} parent=1 // pred_check
      _
    $region15: #{policy_network_forward.1} parent=1 // pred_check_branch
      %39 = sbr.rel (0) target = $region17
    $region16: #{policy_network_forward.1} parent=1 // pred_region
      %s41 = ssub.s32 1024, 1024
      %42 = vsyncadd [#allocation5], %s41
      %s43 = sshll.u32 [#allocation6], 4
      %s44 = int_to_ptr.vmem [resolvable:$true] %s43
      %49 = dma.hbm_to_vmem [thread:$0]  %s3, 1024, %s44, [#allocation5], 64, 64, 4
    $region17: #{policy_network_forward.1} parent=1 // pred_fallthru
      _
    // Predicated region
    $region18: #{policy_network_forward.1} parent=1 // pred_check
      _
    $region19: #{policy_network_forward.1} parent=1 // pred_check_branch
      %51 = sbr.rel (0) target = $region21
    $region20: #{policy_network_forward.1} parent=1 // pred_region
      _
    $region21: #{policy_network_forward.1} parent=1 // pred_fallthru
      _
    // Predicated region
    $region22: #{policy_network_forward.1} parent=1 // pred_check
      _
    $region23: #{policy_network_forward.1} parent=1 // pred_check_branch
      %53 = sbr.rel (0) target = $region25
    $region24: #{policy_network_forward.1} parent=1 // pred_region
      %54 = dma.done [#allocation3], 512
    $region25: #{policy_network_forward.1} parent=1 // pred_fallthru
      _
    // Predicated region
    $region26: #{policy_network_forward.1} parent=1 // pred_check
      _
    $region27: #{policy_network_forward.1} parent=1 // pred_check_branch
      %56 = sbr.rel (0) target = $region29
    $region28: #{policy_network_forward.1} parent=1 // pred_region
      %57 = dma.done [#allocation5], 1024
    $region29: #{policy_network_forward.1} parent=1 // pred_fallthru
      _
    // Predicated region
    $region30: #{policy_network_forward.1} parent=1 // pred_check
      _
    $region31: #{policy_network_forward.1} parent=1 // pred_check_branch
      %59 = sbr.rel (0) target = $region33
    $region32: #{policy_network_forward.1} parent=1 // pred_region
      %60 = dma.done [#allocation5], 1024
    $region33: #{policy_network_forward.1} parent=1 // pred_fallthru
      _
    %v62 = vld [vmem:[#allocation2] sm:$0xff]
    %v63 = vld [vmem:[#allocation2 + $0x8] sm:$0xff]
    %v64 = vld [vmem:[#allocation2 + $0x10] sm:$0xff]
    %v65 = vld [vmem:[#allocation2 + $0x18] sm:$0xff]
    %v66 = vpack.c.bf16 %v63, %v62
    %v67 = vpack.c.bf16 %v65, %v64
    %v68 = vld [vmem:[#allocation4] sm:$0xf]
    %v69 = vld [vmem:[#allocation4 + $0x4] sm:$0xf]
    %v70 = vld [vmem:[#allocation4 + $0x8] sm:$0xf]
    %v71 = vld [vmem:[#allocation4 + $0xc] sm:$0xf]
    %v72 = vld [vmem:[#allocation4 + $0x10] sm:$0xf]
    %v73 = vld [vmem:[#allocation4 + $0x14] sm:$0xf]
    %v74 = vld [vmem:[#allocation4 + $0x18] sm:$0xf]
    %v75 = vld [vmem:[#allocation4 + $0x1c] sm:$0xf]
    %v76 = vld [vmem:[#allocation4 + $0x20] sm:$0xf]
    %v77 = vld [vmem:[#allocation4 + $0x24] sm:$0xf]
    %v78 = vld [vmem:[#allocation4 + $0x28] sm:$0xf]
    %v79 = vld [vmem:[#allocation4 + $0x2c] sm:$0xf]
    %v80 = vld [vmem:[#allocation4 + $0x30] sm:$0xf]
    %v81 = vld [vmem:[#allocation4 + $0x34] sm:$0xf]
    %v82 = vld [vmem:[#allocation4 + $0x38] sm:$0xf]
    %v83 = vld [vmem:[#allocation4 + $0x3c] sm:$0xf]
    %v84 = vld [vmem:[%s2] sm:$0x1]
    %v86 = vlaneseq
    %v87 = vshrl.u32 %v86, 7
    %v88 = vsub.s32 0, %v87
    %v89 = vrot.slane %v84, %v88
    %v107 = vunpack.c.l.b16 %v68
    %v108 = vunpack.c.l.b16 %v69
    %v109 = vunpack.c.l.b16 %v70
    %v110 = vunpack.c.l.b16 %v71
    %v111 = vunpack.c.l.b16 %v72
    %v112 = vunpack.c.l.b16 %v73
    %v113 = vunpack.c.l.b16 %v74
    %v114 = vunpack.c.l.b16 %v75
    %v115 = vunpack.c.l.b16 %v76
    %v116 = vunpack.c.l.b16 %v77
    %v117 = vunpack.c.l.b16 %v78
    %v118 = vunpack.c.l.b16 %v79
    %v119 = vunpack.c.l.b16 %v80
    %v120 = vunpack.c.l.b16 %v81
    %v121 = vunpack.c.l.b16 %v82
    %v122 = vunpack.c.l.b16 %v83
    %v123 = vpack.c.b16 %v108, %v107
    %v124 = vpack.c.b16 %v110, %v109
    %v125 = vpack.c.b16 %v112, %v111
    %v126 = vpack.c.b16 %v114, %v113
    %v127 = vpack.c.b16 %v116, %v115
    %v128 = vpack.c.b16 %v118, %v117
    %v129 = vpack.c.b16 %v120, %v119
    %v130 = vpack.c.b16 %v122, %v121
    %139 = vmatprep.subr.bf16.mxu0 0
    %140 = vmatpush1.bf16.msra.mxu0 %v123
    %141 = vmatprep.subr.bf16.mxu0 0
    %142 = vmatpush1.bf16.msra.mxu0 %v124
    %143 = vmatprep.subr.bf16.mxu0 0
    %144 = vmatpush1.bf16.msra.mxu0 %v125
    %145 = vmatprep.subr.bf16.mxu0 0
    %146 = vmatpush1.bf16.msra.mxu0 %v126
    %147 = vmatprep.subr.bf16.mxu0 0
    %148 = vmatpush1.bf16.msra.mxu0 %v127
    %149 = vmatprep.subr.bf16.mxu0 0
    %150 = vmatpush1.bf16.msra.mxu0 %v128
    %151 = vmatprep.subr.bf16.mxu0 0
    %152 = vmatpush1.bf16.msra.mxu0 %v129
    %153 = vmatprep.subr.bf16.mxu0 0
    %154 = vmatpush1.bf16.msra.mxu0 %v130
    %155 = vmatprep.subr.bf16.mxu0 0
    %156 = vmatpush1.bf16.msra.mxu0 0
    %157 = vmatprep.subr.bf16.mxu0 0
    %158 = vmatpush1.bf16.msra.mxu0 0
    %159 = vmatprep.subr.bf16.mxu0 0
    %160 = vmatpush1.bf16.msra.mxu0 0
    %161 = vmatprep.subr.bf16.mxu0 0
    %162 = vmatpush1.bf16.msra.mxu0 0
    %163 = vmatprep.subr.bf16.mxu0 0
    %164 = vmatpush1.bf16.msra.mxu0 0
    %165 = vmatprep.subr.bf16.mxu0 0
    %166 = vmatpush1.bf16.msra.mxu0 0
    %167 = vmatprep.subr.bf16.mxu0 0
    %168 = vmatpush1.bf16.msra.mxu0 0
    %169 = vmatprep.subr.bf16.mxu0 0
    %170 = vmatpush1.bf16.msra.mxu0 0
    %171 = vmatprep.mubr.bf16.mxu0 0
    %172 = vmatmul.mubr.bf16.gmra.mrb[0].mxu0 %v66
    %v173 = vpop.f32.mrb[0].mxu0
    %v174 = vadd.f32 %v89, %v173
    %v175 = vpop.f32.mrb[0].mxu0
    %v176 = vpop.f32.mrb[0].mxu0
    %v177 = vadd.f32 %v89, %v176
    %v178 = vpop.f32.mrb[0].mxu0
    %179 = vmatprep.mubr.bf16.mxu0 0
    %180 = vmatmul.mubr.bf16.gmra.mrb[0].mxu0 %v67
    %v181 = vpop.f32.mrb[0].mxu0
    %v182 = vadd.f32 %v89, %v181
    %v183 = vpop.f32.mrb[0].mxu0
    %v184 = vpop.f32.mrb[0].mxu0
    %v185 = vadd.f32 %v89, %v184
    %v186 = vpop.f32.mrb[0].mxu0
    %187 = vdwg.mxu0
    %v188 = vmax.f32 %v174, 0.0
    %v189 = vmax.f32 %v177, 0.0
    %v190 = vmax.f32 %v182, 0.0
    %v191 = vmax.f32 %v185, 0.0
    %v192 = vpack.c.bf16 %v189, %v188
    %v193 = vpack.c.bf16 %v191, %v190
    %v194 = vld [vmem:[#allocation6] sm:$0xf]
    %v195 = vld [vmem:[#allocation6 + $0x4] sm:$0xf]
    %v196 = vld [vmem:[#allocation6 + $0x8] sm:$0xf]
    %v197 = vld [vmem:[#allocation6 + $0xc] sm:$0xf]
    %v198 = vld [vmem:[#allocation6 + $0x10] sm:$0xf]
    %v199 = vld [vmem:[#allocation6 + $0x14] sm:$0xf]
    %v200 = vld [vmem:[#allocation6 + $0x18] sm:$0xf]
    %v201 = vld [vmem:[#allocation6 + $0x1c] sm:$0xf]
    %v202 = vld [vmem:[#allocation6 + $0x20] sm:$0xf]
    %v203 = vld [vmem:[#allocation6 + $0x24] sm:$0xf]
    %v204 = vld [vmem:[#allocation6 + $0x28] sm:$0xf]
    %v205 = vld [vmem:[#allocation6 + $0x2c] sm:$0xf]
    %v206 = vld [vmem:[#allocation6 + $0x30] sm:$0xf]
    %v207 = vld [vmem:[#allocation6 + $0x34] sm:$0xf]
    %v208 = vld [vmem:[#allocation6 + $0x38] sm:$0xf]
    %v209 = vld [vmem:[#allocation6 + $0x3c] sm:$0xf]
    %v210 = vld [vmem:[%s4] sm:$0x1]
    %v212 = vlaneseq
    %v213 = vshrl.u32 %v212, 7
    %v214 = vsub.s32 0, %v213
    %v215 = vrot.slane %v210, %v214
    %v233 = vunpack.c.l.b16 %v194
    %v234 = vunpack.c.l.b16 %v195
    %v235 = vunpack.c.l.b16 %v196
    %v236 = vunpack.c.l.b16 %v197
    %v237 = vunpack.c.l.b16 %v198
    %v238 = vunpack.c.l.b16 %v199
    %v239 = vunpack.c.l.b16 %v200
    %v240 = vunpack.c.l.b16 %v201
    %v241 = vunpack.c.l.b16 %v202
    %v242 = vunpack.c.l.b16 %v203
    %v243 = vunpack.c.l.b16 %v204
    %v244 = vunpack.c.l.b16 %v205
    %v245 = vunpack.c.l.b16 %v206
    %v246 = vunpack.c.l.b16 %v207
    %v247 = vunpack.c.l.b16 %v208
    %v248 = vunpack.c.l.b16 %v209
    %v249 = vpack.c.b16 %v234, %v233
    %v250 = vpack.c.b16 %v236, %v235
    %v251 = vpack.c.b16 %v238, %v237
    %v252 = vpack.c.b16 %v240, %v239
    %v253 = vpack.c.b16 %v242, %v241
    %v254 = vpack.c.b16 %v244, %v243
    %v255 = vpack.c.b16 %v246, %v245
    %v256 = vpack.c.b16 %v248, %v247
    %265 = vmatprep.subr.bf16.mxu0 0
    %266 = vmatpush1.bf16.msra.mxu0 %v249
    %267 = vmatprep.subr.bf16.mxu0 0
    %268 = vmatpush1.bf16.msra.mxu0 %v250
    %269 = vmatprep.subr.bf16.mxu0 0
    %270 = vmatpush1.bf16.msra.mxu0 %v251
    %271 = vmatprep.subr.bf16.mxu0 0
    %272 = vmatpush1.bf16.msra.mxu0 %v252
    %273 = vmatprep.subr.bf16.mxu0 0
    %274 = vmatpush1.bf16.msra.mxu0 %v253
    %275 = vmatprep.subr.bf16.mxu0 0
    %276 = vmatpush1.bf16.msra.mxu0 %v254
    %277 = vmatprep.subr.bf16.mxu0 0
    %278 = vmatpush1.bf16.msra.mxu0 %v255
    %279 = vmatprep.subr.bf16.mxu0 0
    %280 = vmatpush1.bf16.msra.mxu0 %v256
    %281 = vmatprep.subr.bf16.mxu0 0
    %282 = vmatpush1.bf16.msra.mxu0 0
    %283 = vmatprep.subr.bf16.mxu0 0
    %284 = vmatpush1.bf16.msra.mxu0 0
    %285 = vmatprep.subr.bf16.mxu0 0
    %286 = vmatpush1.bf16.msra.mxu0 0
    %287 = vmatprep.subr.bf16.mxu0 0
    %288 = vmatpush1.bf16.msra.mxu0 0
    %289 = vmatprep.subr.bf16.mxu0 0
    %290 = vmatpush1.bf16.msra.mxu0 0
    %291 = vmatprep.subr.bf16.mxu0 0
    %292 = vmatpush1.bf16.msra.mxu0 0
    %293 = vmatprep.subr.bf16.mxu0 0
    %294 = vmatpush1.bf16.msra.mxu0 0
    %295 = vmatprep.subr.bf16.mxu0 0
    %296 = vmatpush1.bf16.msra.mxu0 0
    %297 = vmatprep.mubr.bf16.mxu0 0
    %298 = vmatmul.mubr.bf16.gmra.mrb[0].mxu0 %v192
    %v299 = vpop.f32.mrb[0].mxu0
    %v300 = vadd.f32 %v215, %v299
    %v301 = vpop.f32.mrb[0].mxu0
    %v302 = vpop.f32.mrb[0].mxu0
    %v303 = vadd.f32 %v215, %v302
    %v304 = vpop.f32.mrb[0].mxu0
    %305 = vmatprep.mubr.bf16.mxu0 0
    %306 = vmatmul.mubr.bf16.gmra.mrb[0].mxu0 %v193
    %v307 = vpop.f32.mrb[0].mxu0
    %v308 = vadd.f32 %v215, %v307
    %v309 = vpop.f32.mrb[0].mxu0
    %v310 = vpop.f32.mrb[0].mxu0
    %v311 = vadd.f32 %v215, %v310
    %v312 = vpop.f32.mrb[0].mxu0
    %313 = vdwg.mxu0
    %314 = vmax.xlane.f32.xlu0 %v300
    %v315 = vpop.xlane.xlu0 %314
    %316 = vmax.xlane.f32.xlu0 %v303
    %v317 = vpop.xlane.xlu0 %316
    %318 = vmax.xlane.f32.xlu0 %v308
    %v319 = vpop.xlane.xlu0 %318
    %320 = vmax.xlane.f32.xlu0 %v311
    %v321 = vpop.xlane.xlu0 %320
    %v322 = vsub.f32 %v300, %v315
    %v323 = vsub.f32 %v303, %v317
    %v324 = vsub.f32 %v308, %v319
    %v325 = vsub.f32 %v311, %v321
    %v326 = vmul.f32 %v322, 1.442695
    %v327 = vpow.pop %v326
    %v328 = vmul.f32 %v323, 1.442695
    %v329 = vpow.pop %v328
    %v330 = vmul.f32 %v324, 1.442695
    %v331 = vpow.pop %v330
    %v332 = vmul.f32 %v325, 1.442695
    %v333 = vpow.pop %v332
    %334 = vadd.xlane.f32.xlu0 %v327
    %v335 = vpop.xlane.xlu0 %334
    %336 = vadd.xlane.f32.xlu0 %v329
    %v337 = vpop.xlane.xlu0 %336
    %338 = vadd.xlane.f32.xlu0 %v331
    %v339 = vpop.xlane.xlu0 %338
    %340 = vadd.xlane.f32.xlu0 %v333
    %v341 = vpop.xlane.xlu0 %340
    %v342 = vrcp.pop %v335
    %v343 = vmul.f32 %v327, %v342
    %v344 = vrcp.pop %v337
    %v345 = vmul.f32 %v329, %v344
    %v346 = vrcp.pop %v339
    %v347 = vmul.f32 %v331, %v346
    %v348 = vrcp.pop %v341
    %v349 = vmul.f32 %v333, %v348
    %350 = vst [vmem:[%s5] sm:$0xff] %v343
    %351 = vst [vmem:[%s5 + $0x8] sm:$0xff] %v345
    %352 = vst [vmem:[%s5 + $0x10] sm:$0xff] %v347
    %353 = vst [vmem:[%s5 + $0x18] sm:$0xff] %v349
    // Predicated region
    $region34: #{policy_network_forward.1} parent=1 // pred_check
      _
    $region35: #{policy_network_forward.1} parent=1 // pred_check_branch
      %355 = sbr.rel (0) target = $region37
    $region36: #{policy_network_forward.1} parent=1 // pred_region
      _
    $region37: #{policy_network_forward.1} parent=1 // pred_fallthru
      _
    // Predicated region
    $region38: #{policy_network_forward.1} parent=1 // pred_check
      _
    $region39: #{policy_network_forward.1} parent=1 // pred_check_branch
      %357 = sbr.rel (0) target = $region41
    $region40: #{policy_network_forward.1} parent=1 // pred_region
      _
    $region41: #{policy_network_forward.1} parent=1 // pred_fallthru
      _
    %358 = vsyncpa [#allocation3], 1
    %359 = vsyncpa [#allocation5], 1

</llo_original>
